<compile_context>
chip_gen: v5e
topology: v5e:2x2
jax: 0.10.0
libtpu: 0.0.40
codegen_flags: <defaults>
</compile_context>

<pallas_src>
import functools

import jax
import jax.numpy as jnp
from jax.experimental import pallas as pl
from jax.experimental.pallas import tpu as pltpu


def _cls_reg_loss_kernel(cls_scale, reg_scale, n_rows,
                         logits_ref, cls_tgt_ref, pts_pred_ref, pts_tgt_ref,
                         out_ref):
    i = pl.program_id(0)

    @pl.when(i == 0)
    def _init():
        out_ref[...] = jnp.zeros_like(out_ref)

    tn = logits_ref.shape[0]
    # Mask rows of the (possibly padded) last tile; padded rows contribute 0.
    row_ids = i * tn + jax.lax.broadcasted_iota(jnp.int32, (tn, 1), 0)
    valid = row_ids < n_rows                                        # (TN, 1)

    x = jnp.where(valid, logits_ref[...].astype(jnp.float32), 0.0)   # (TN, C)
    tgt = jnp.where(valid, cls_tgt_ref[...].astype(jnp.float32), 0.0)
    c = x.shape[1]

    # Per-sample inlier/outlier fractions (single cross-lane reduction).
    w_pos = jnp.sum(tgt, axis=1, keepdims=True) * (1.0 / c)          # sum(t)/C
    w_neg = 1.0 - w_pos                                              # sum(1-t)/C

    # log-sigmoid via softplus: one exp + one log per element.
    #   softplus(x)  = max(x,0) + log(1 + exp(-|x|)) = -log(1 - sigmoid(x))
    #   softplus(-x) = softplus(x) - x               = -log(sigmoid(x))
    l = jnp.log(1.0 + jnp.exp(-jnp.abs(x)))
    sp_pos = jnp.maximum(x, 0.0) + l
    sp_neg = sp_pos - x

    # "Crossed" weighting per the reference: target==1 -> w_neg, target==0 -> w_pos.
    # Masked rows have tgt=0 and w_pos=0, so both terms vanish.
    weighted = tgt * (w_neg * sp_neg) + (1.0 - tgt) * (w_pos * sp_pos)
    cls_partial = jnp.sum(weighted)

    diff = jnp.where(
        valid,
        pts_pred_ref[...].astype(jnp.float32) - pts_tgt_ref[...].astype(jnp.float32),
        0.0)
    reg_partial = jnp.sum(jnp.abs(diff))

    out_ref[...] += jnp.reshape(cls_scale * cls_partial + reg_scale * reg_partial,
                                (1, 1))


def _round_up(x, m):
    return ((x + m - 1) // m) * m


def cls_reg_loss(use_for_cls_loss, cls_target, points_pred, points_target,
                 alpha=1.0, beta=1.0):
    """Pallas implementation of ClsRegLoss.forward. Returns a scalar f32."""
    n, c = use_for_cls_loss.shape
    # Free (contiguous) reshape: (N, M, 3) -> (N, M*3).  No dtype casts here.
    pp = points_pred.reshape(n, -1)
    pt = points_target.reshape(n, -1)
    p = pp.shape[1]

    # Tile over N.  Keep the double-buffered working set of all four inputs
    # under ~4 MiB so it is safe on every generation's scoped-VMEM default.
    bytes_per_row = ((use_for_cls_loss.dtype.itemsize + cls_target.dtype.itemsize) * c
                     + (pp.dtype.itemsize + pt.dtype.itemsize) * p)
    tn = min(512, max(8, (4 << 20) // max(1, 2 * bytes_per_row)))
    tn = min(tn, _round_up(n, 8))
    tn = max(8, (tn // 8) * 8)
    grid = (pl.cdiv(n, tn),)

    # Precomputed reciprocal scale constants (no divides in the hot path).
    cls_scale = float(alpha) / float(n * c)   # alpha * mean over N of mean over C
    reg_scale = float(beta) / float(n * p)    # beta  * mean over all point coords

    kernel = functools.partial(_cls_reg_loss_kernel, cls_scale, reg_scale, n)

    out = pl.pallas_call(
        kernel,
        out_shape=jax.ShapeDtypeStruct((1, 1), jnp.float32),
        grid=grid,
        in_specs=[
            pl.BlockSpec((tn, c), lambda i: (i, 0)),
            pl.BlockSpec((tn, c), lambda i: (i, 0)),
            pl.BlockSpec((tn, p), lambda i: (i, 0)),
            pl.BlockSpec((tn, p), lambda i: (i, 0)),
        ],
        out_specs=pl.BlockSpec((1, 1), lambda i: (0, 0)),
        compiler_params=pltpu.CompilerParams(
            dimension_semantics=("arbitrary",),
            vmem_limit_bytes=32 * 1024 * 1024),
    )(use_for_cls_loss, cls_target, pp, pt)
    return out[0, 0]


def _reference_jax(logits, target, pp, pt, alpha, beta):
    """Pure-JAX reference mirroring the PyTorch module (sigmoid + clamped logs)."""
    logits = logits.astype(jnp.float32)
    target = target.astype(jnp.float32)
    n, c = logits.shape
    w_pos = jnp.sum(target, axis=1, keepdims=True) / c
    w_neg = jnp.sum(1.0 - target, axis=1, keepdims=True) / c
    w = jnp.where(target == 0.0, w_pos, w_neg)
    pred = jax.nn.sigmoid(logits)
    bce = -(target * jnp.maximum(jnp.log(pred), -100.0)
            + (1.0 - target) * jnp.maximum(jnp.log(1.0 - pred), -100.0))
    cls_loss = jnp.mean(jnp.mean(w * bce, axis=1))
    reg_loss = jnp.mean(jnp.abs(pp - pt))
    return alpha * cls_loss + beta * reg_loss


if __name__ == "__main__":
    key = jax.random.PRNGKey(0)
    k1, k2, k3, k4 = jax.random.split(key, 4)

    N, C, M = 2, 16, 8           # batch, cls features, num correspondences
    alpha, beta = 0.7, 1.3       # deterministic loss weights

    use_for_cls_loss = jax.random.normal(k1, (N, C), dtype=jnp.float32)
    cls_target = jax.random.bernoulli(k2, 0.5, (N, C)).astype(jnp.float32)
    points_pred = jax.random.normal(k3, (N, M, 3), dtype=jnp.float32)
    points_target = jax.random.normal(k4, (N, M, 3), dtype=jnp.float32)

    out = cls_reg_loss(use_for_cls_loss, cls_target, points_pred, points_target,
                       alpha=alpha, beta=beta)
    out = jax.block_until_ready(out)

    ref = _reference_jax(use_for_cls_loss, cls_target,
                         points_pred.reshape(N, -1),
                         points_target.reshape(N, -1), alpha, beta)
    assert jnp.allclose(out, ref, rtol=1e-5, atol=1e-5), (out, ref)

    print("KERNEL_OK")
</pallas_src>

<mosaic_0001>
module attributes {stable_mosaic.version = 11 : i64} {
  func.func @_cls_reg_loss_kernel(%arg0: i32, %arg1: memref<8x16xf32, #tpu.memory_space<vmem>>, %arg2: memref<8x16xf32, #tpu.memory_space<vmem>>, %arg3: memref<8x24xf32, #tpu.memory_space<vmem>>, %arg4: memref<8x24xf32, #tpu.memory_space<vmem>>, %arg5: memref<1x1xf32, #tpu.memory_space<vmem>>) attributes {dimension_semantics = [#tpu.dimension_semantics<arbitrary>], iteration_bounds = array<i64: 1>, scalar_prefetch = 0 : i64, scratch_operands = 0 : i64, tpu.core_type = #tpu.core_type<tc>, window_params = [{transform_indices = @transform_0, window_bounds = array<i64: 8, 16>}, {transform_indices = @transform_1, window_bounds = array<i64: 8, 16>}, {transform_indices = @transform_2, window_bounds = array<i64: 8, 24>}, {transform_indices = @transform_3, window_bounds = array<i64: 8, 24>}, {pipeline_mode = #tpu.pipeline_mode<synchronous>, transform_indices = @transform_4, window_bounds = array<i64: 1, 1>}]} {
    %c0_i32 = arith.constant 0 : i32
    %0 = arith.cmpi eq, %arg0, %c0_i32 : i32
    %1 = arith.extui %0 : i1 to i32
    %c0_i32_0 = arith.constant 0 : i32
    %2 = arith.cmpi ne, %1, %c0_i32_0 : i32
    scf.if %2 {
      %cst_25 = arith.constant 0.000000e+00 : f32
      %68 = vector.broadcast %cst_25 : f32 to vector<1x1xf32>
      %c0_26 = arith.constant 0 : index
      %c0_27 = arith.constant 0 : index
      %69 = vector.load %arg5[%c0_26, %c0_27] : memref<1x1xf32, #tpu.memory_space<vmem>>, vector<1x1xf32>
      tpu.vector_store %arg5[%c0_26, %c0_27], %68 {strides = array<i32>} : memref<1x1xf32, #tpu.memory_space<vmem>>, vector<1x1xf32>,
    } else {
    }
    %c8_i32 = arith.constant 8 : i32
    %3 = arith.muli %arg0, %c8_i32 : i32
    %4 = tpu.iota {dimensions = array<i32: 0>} : vector<8x1xi32>
    %5 = vector.broadcast %3 : i32 to vector<8x1xi32>
    %6 = arith.addi %5, %4 : vector<8x1xi32>
    %c2_i32 = arith.constant 2 : i32
    %7 = vector.broadcast %c2_i32 : i32 to vector<8x1xi32>
    %8 = arith.cmpi slt, %6, %7 : vector<8x1xi32>
    %c0 = arith.constant 0 : index
    %c0_1 = arith.constant 0 : index
    %9 = vector.load %arg1[%c0, %c0_1] : memref<8x16xf32, #tpu.memory_space<vmem>>, vector<8x16xf32>
    %cst = arith.constant 0.000000e+00 : f32
    %10 = vector.shape_cast %8 : vector<8x1xi1> to vector<8x1xi1>
    %11 = vector.broadcast %10 : vector<8x1xi1> to vector<8x16xi1>
    %12 = vector.broadcast %cst : f32 to vector<8x16xf32>
    %13 = arith.select %11, %9, %12 : vector<8x16xi1>, vector<8x16xf32>
    %c0_2 = arith.constant 0 : index
    %c0_3 = arith.constant 0 : index
    %14 = vector.load %arg2[%c0_2, %c0_3] : memref<8x16xf32, #tpu.memory_space<vmem>>, vector<8x16xf32>
    %cst_4 = arith.constant 0.000000e+00 : f32
    %15 = vector.shape_cast %8 : vector<8x1xi1> to vector<8x1xi1>
    %16 = vector.broadcast %15 : vector<8x1xi1> to vector<8x16xi1>
    %17 = vector.broadcast %cst_4 : f32 to vector<8x16xf32>
    %18 = arith.select %16, %14, %17 : vector<8x16xi1>, vector<8x16xf32>
    %cst_5 = arith.constant dense<0.000000e+00> : vector<8xf32>
    %19 = vector.multi_reduction <add>, %18, %cst_5 [1] : vector<8x16xf32> to vector<8xf32>
    %20 = vector.shape_cast %19 : vector<8xf32> to vector<8x1xf32>
    %cst_6 = arith.constant 6.250000e-02 : f32
    %21 = vector.broadcast %cst_6 : f32 to vector<8x1xf32>
    %22 = arith.mulf %20, %21 : vector<8x1xf32>
    %cst_7 = arith.constant 1.000000e+00 : f32
    %23 = vector.broadcast %cst_7 : f32 to vector<8x1xf32>
    %24 = arith.subf %23, %22 : vector<8x1xf32>
    %25 = math.absf %13 : vector<8x16xf32>
    %cst_8 = arith.constant 0.000000e+00 : f32
    %26 = vector.broadcast %cst_8 : f32 to vector<8x16xf32>
    %27 = arith.subf %26, %25 : vector<8x16xf32>
    %28 = math.exp %27 : vector<8x16xf32>
    %cst_9 = arith.constant 1.000000e+00 : f32
    %29 = vector.broadcast %cst_9 : f32 to vector<8x16xf32>
    %30 = arith.addf %29, %28 : vector<8x16xf32>
    %31 = math.log %30 : vector<8x16xf32>
    %cst_10 = arith.constant 0.000000e+00 : f32
    %32 = vector.broadcast %cst_10 : f32 to vector<8x16xf32>
    %33 = arith.maximumf %13, %32 : vector<8x16xf32>
    %34 = arith.addf %33, %31 : vector<8x16xf32>
    %35 = arith.subf %34, %13 : vector<8x16xf32>
    %36 = vector.broadcast %24 : vector<8x1xf32> to vector<8x16xf32>
    %37 = arith.mulf %36, %35 : vector<8x16xf32>
    %38 = arith.mulf %18, %37 : vector<8x16xf32>
    %cst_11 = arith.constant 1.000000e+00 : f32
    %39 = vector.broadcast %cst_11 : f32 to vector<8x16xf32>
    %40 = arith.subf %39, %18 : vector<8x16xf32>
    %41 = vector.broadcast %22 : vector<8x1xf32> to vector<8x16xf32>
    %42 = arith.mulf %41, %34 : vector<8x16xf32>
    %43 = arith.mulf %40, %42 : vector<8x16xf32>
    %44 = arith.addf %38, %43 : vector<8x16xf32>
    %45 = vector.shape_cast %44 : vector<8x16xf32> to vector<1x8x16xf32>
    %cst_12 = arith.constant dense<0.000000e+00> : vector<1xf32>
    %46 = vector.multi_reduction <add>, %45, %cst_12 [1, 2] : vector<1x8x16xf32> to vector<1xf32>
    %47 = vector.shape_cast %46 : vector<1xf32> to vector<1x1x1xf32>
    %48 = vector.extract %47[0, 0, 0] : f32 from vector<1x1x1xf32>
    %c0_13 = arith.constant 0 : index
    %c0_14 = arith.constant 0 : index
    %49 = vector.load %arg3[%c0_13, %c0_14] : memref<8x24xf32, #tpu.memory_space<vmem>>, vector<8x24xf32>
    %c0_15 = arith.constant 0 : index
    %c0_16 = arith.constant 0 : index
    %50 = vector.load %arg4[%c0_15, %c0_16] : memref<8x24xf32, #tpu.memory_space<vmem>>, vector<8x24xf32>
    %51 = arith.subf %49, %50 : vector<8x24xf32>
    %cst_17 = arith.constant 0.000000e+00 : f32
    %52 = vector.shape_cast %8 : vector<8x1xi1> to vector<8x1xi1>
    %53 = vector.broadcast %52 : vector<8x1xi1> to vector<8x24xi1>
    %54 = vector.broadcast %cst_17 : f32 to vector<8x24xf32>
    %55 = arith.select %53, %51, %54 : vector<8x24xi1>, vector<8x24xf32>
    %56 = math.absf %55 : vector<8x24xf32>
    %57 = vector.shape_cast %56 : vector<8x24xf32> to vector<1x8x24xf32>
    %cst_18 = arith.constant dense<0.000000e+00> : vector<1xf32>
    %58 = vector.multi_reduction <add>, %57, %cst_18 [1, 2] : vector<1x8x24xf32> to vector<1xf32>
    %59 = vector.shape_cast %58 : vector<1xf32> to vector<1x1x1xf32>
    %60 = vector.extract %59[0, 0, 0] : f32 from vector<1x1x1xf32>
    %c0_19 = arith.constant 0 : index
    %c0_20 = arith.constant 0 : index
    %61 = vector.load %arg5[%c0_19, %c0_20] : memref<1x1xf32, #tpu.memory_space<vmem>>, vector<1x1xf32>
    %cst_21 = arith.constant 2.187500e-02 : f32
    %62 = arith.mulf %cst_21, %48 : f32
    %cst_22 = arith.constant 0.0270833336 : f32
    %63 = arith.mulf %cst_22, %60 : f32
    %64 = arith.addf %62, %63 : f32
    %65 = vector.broadcast %64 : f32 to vector<1x1xf32>
    %66 = arith.addf %61, %65 : vector<1x1xf32>
    %c0_23 = arith.constant 0 : index
    %c0_24 = arith.constant 0 : index
    %67 = vector.load %arg5[%c0_23, %c0_24] : memref<1x1xf32, #tpu.memory_space<vmem>>, vector<1x1xf32>
    tpu.vector_store %arg5[%c0_23, %c0_24], %66 {strides = array<i32>} : memref<1x1xf32, #tpu.memory_space<vmem>>, vector<1x1xf32>,
    return
  }
  func.func @transform_0(%arg0: i32) -> (i32, i32) {
    %c0_i32 = arith.constant 0 : i32
    %c0_i32_0 = arith.constant 0 : i32
    return %arg0, %c0_i32 : i32, i32
  }
  func.func @transform_1(%arg0: i32) -> (i32, i32) {
    %c0_i32 = arith.constant 0 : i32
    %c0_i32_0 = arith.constant 0 : i32
    return %arg0, %c0_i32 : i32, i32
  }
  func.func @transform_2(%arg0: i32) -> (i32, i32) {
    %c0_i32 = arith.constant 0 : i32
    %c0_i32_0 = arith.constant 0 : i32
    return %arg0, %c0_i32 : i32, i32
  }
  func.func @transform_3(%arg0: i32) -> (i32, i32) {
    %c0_i32 = arith.constant 0 : i32
    %c0_i32_0 = arith.constant 0 : i32
    return %arg0, %c0_i32 : i32, i32
  }
  func.func @transform_4(%arg0: i32) -> (i32, i32) {
    %c0_i32 = arith.constant 0 : i32
    %c0_i32_0 = arith.constant 0 : i32
    %c0_i32_1 = arith.constant 0 : i32
    return %c0_i32, %c0_i32_0 : i32, i32
  }
}

</mosaic_0001>

<llo_original>
// kernel: tpu_custom_call.1
$region0: #{tpu_custom_call.1}
  #allocation0 [shape = 'u32[]', space=smem, size = 0x4, offset = 0x4, fixed_abs, tag = 'smem constant byte address 0x4 - core index']
  #allocation1 [shape = 'u32[72,128]{1,0:T(1,128)}', space=vmem, size = 0x9000, scoped, tag = 'internal scratch']
  %s0 = inlined_call_operand.hbm [shape: f32[2,16], index: 0, kind: input, shape index: {}]
  %s1 = inlined_call_operand.hbm [shape: f32[2,16], index: 1, kind: input, shape index: {}]
  %s2 = inlined_call_operand.hbm [shape: f32[2,24], index: 2, kind: input, shape index: {}]
  %s3 = inlined_call_operand.vmem [shape: f32[2,24], index: 3, kind: input, shape index: {}]
  %s4 = inlined_call_operand.hbm [shape: f32[1,1], index: 4, kind: output, shape index: {}]
  %s5 = sld [smem:[#allocation0]]
  $region42: #{tpu_custom_call.1} parent=0
    _
  %s7 = ssub.s32 1, %s5
  %s8 = scalar_select 0, %s7, %s5
  $region1: #{tpu_custom_call.1} parent=0
    #allocation2 [shape = 'u8[4096]{0}', space=vmem, size = 0x1000, scoped, tag = 'input window, operand 0, single buffered']
    #allocation3 [shape = 's32[1]{0}', space=sflag, size = 0x4, scoped, tag = 'scoped memory for tpu_custom_call.1']
    #allocation4 [shape = 's32[1]{0}', space=sflag, size = 0x4, scoped, tag = 'scoped memory for tpu_custom_call.1']
    #allocation5 [shape = 'u8[4096]{0}', space=vmem, size = 0x1000, scoped, tag = 'input window, operand 1, single buffered']
    #allocation6 [shape = 's32[1]{0}', space=sflag, size = 0x4, scoped, tag = 'scoped memory for tpu_custom_call.1']
    #allocation7 [shape = 'u8[4096]{0}', space=vmem, size = 0x1000, scoped, tag = 'input window, operand 2, single buffered']
    #allocation8 [shape = 'u8[512]{0}', space=vmem, size = 0x400, scoped, tag = 'output window, operand 0, single buffered']
    %9 = vsyncpa [#allocation3], 0
    %10 = vsyncpa [#allocation6], 0
    %11 = vsyncpa [#allocation4], 0
    // Predicated region
    $region2: #{tpu_custom_call.1} parent=1 // pred_check
      _
    $region3: #{tpu_custom_call.1} parent=1 // pred_check_branch
      %13 = sbr.rel (0) target = $region5
    $region4: #{tpu_custom_call.1} parent=1 // pred_region
      %15 = vsyncadd [#allocation3], 96
      %s16 = sshll.u32 %s0, 4
      %s17 = int_to_ptr.hbm [resolvable:$true] %s16
      %s18 = sshll.u32 [#allocation2], 4
      %s19 = int_to_ptr.vmem [resolvable:$true] %s18
      %24 = dma.hbm_to_vmem [thread:$0]  %s17, 32, %s19, [#allocation3], 32, 32, 2
    $region5: #{tpu_custom_call.1} parent=1 // pred_fallthru
      _
    // Predicated region
    $region6: #{tpu_custom_call.1} parent=1 // pred_check
      _
    $region7: #{tpu_custom_call.1} parent=1 // pred_check_branch
      %26 = sbr.rel (0) target = $region9
    $region8: #{tpu_custom_call.1} parent=1 // pred_region
      %28 = vsyncadd [#allocation6], 96
      %s29 = sshll.u32 %s1, 4
      %s30 = int_to_ptr.hbm [resolvable:$true] %s29
      %s31 = sshll.u32 [#allocation5], 4
      %s32 = int_to_ptr.vmem [resolvable:$true] %s31
      %37 = dma.hbm_to_vmem [thread:$0]  %s30, 32, %s32, [#allocation6], 32, 32, 2
    $region9: #{tpu_custom_call.1} parent=1 // pred_fallthru
      _
    // Predicated region
    $region10: #{tpu_custom_call.1} parent=1 // pred_check
      _
    $region11: #{tpu_custom_call.1} parent=1 // pred_check_branch
      %39 = sbr.rel (0) target = $region13
    $region12: #{tpu_custom_call.1} parent=1 // pred_region
      %41 = vsyncadd [#allocation6], 96
      %s42 = sshll.u32 %s2, 4
      %s43 = int_to_ptr.hbm [resolvable:$true] %s42
      %s44 = sshll.u32 [#allocation7], 4
      %s45 = int_to_ptr.vmem [resolvable:$true] %s44
      %50 = dma.hbm_to_vmem [thread:$0]  %s43, 32, %s45, [#allocation6], 32, 32, 2
    $region13: #{tpu_custom_call.1} parent=1 // pred_fallthru
      _
    // Predicated region
    $region14: #{tpu_custom_call.1} parent=1 // pred_check
      _
    $region15: #{tpu_custom_call.1} parent=1 // pred_check_branch
      %52 = sbr.rel (0) target = $region17
    $region16: #{tpu_custom_call.1} parent=1 // pred_region
      _
    $region17: #{tpu_custom_call.1} parent=1 // pred_fallthru
      _
    // Predicated region
    $region18: #{tpu_custom_call.1} parent=1 // pred_check
      _
    $region19: #{tpu_custom_call.1} parent=1 // pred_check_branch
      %54 = sbr.rel (0) target = $region21
    $region20: #{tpu_custom_call.1} parent=1 // pred_region
      %56 = dma.done [#allocation3], 128
    $region21: #{tpu_custom_call.1} parent=1 // pred_fallthru
      _
    // Predicated region
    $region22: #{tpu_custom_call.1} parent=1 // pred_check
      _
    $region23: #{tpu_custom_call.1} parent=1 // pred_check_branch
      %58 = sbr.rel (0) target = $region25
    $region24: #{tpu_custom_call.1} parent=1 // pred_region
      %60 = dma.done [#allocation6], 128
    $region25: #{tpu_custom_call.1} parent=1 // pred_fallthru
      _
    // Predicated region
    $region26: #{tpu_custom_call.1} parent=1 // pred_check
      _
    $region27: #{tpu_custom_call.1} parent=1 // pred_check_branch
      %62 = sbr.rel (0) target = $region29
    $region28: #{tpu_custom_call.1} parent=1 // pred_region
      %64 = dma.done [#allocation6], 128
    $region29: #{tpu_custom_call.1} parent=1 // pred_fallthru
      _
    %p65 = scmp.eq.s32.totalorder 0, 0
    // Predicated region
    $region30: #{tpu_custom_call.1} parent=1 // pred_check
      %p66 = pneg %p65
    $region31: #{tpu_custom_call.1} parent=1 // pred_check_branch
      %68 = sbr.rel (%p66) target = $region33
    $region32: #{tpu_custom_call.1} parent=1 // pred_region
      %vm69 = vcmask 0
      %70 = vst.msk [vmem:[#allocation8] sm:$0x1] %vm69, 0.0
    $region33: #{tpu_custom_call.1} parent=1 // pred_fallthru
      _
    %s71 = smul.u32 0, 8
    %v72 = vlaneseq
    %v73 = vshrl.u32 %v72, 7
    %v74 = vstv %s71
    %v75 = vadd.s32 %v74, %v73
    %vm76 = vcmp.lt.s32.totalorder %v75, 2
    %v77 = vld [vmem:[#allocation2] sm:$0xff]
    %v78 = vsel %vm76, 1, 0
    %vm79 = vcmp.eq.s32.totalorder %v78, 1
    %v80 = vsel %vm79, %v77, 0.0
    %v81 = vld [vmem:[#allocation5] sm:$0xff]
    %v82 = vsel %vm79, %v81, 0.0
    %vm83 = vcmask 130048
    %v84 = vsel %vm83, %v82, 0.0
    %85 = vadd.xlane.f32.xlu0 %v84
    %v86 = vpop.xlane.xlu0 %85
    %v87 = vmul.f32 %v86, 0.0625
    %v88 = vsub.f32 1.0, %v87
    %v89 = vand.u32 2147483647, %v80
    %v90 = vsub.f32 0.0, %v89
    %v91 = vmul.f32 %v90, 1.442695
    %v92 = vpow.pop %v91
    %v93 = vadd.f32 %v92, 1.0
    %v94 = vlog2.pop %v93
    %v95 = vmul.f32 %v94, 0.6931472
    %v96 = vmax.f32 %v80, 0.0
    %v97 = vadd.f32 %v96, %v95
    %v98 = vsub.f32 %v97, %v80
    %v99 = vmul.f32 %v88, %v98
    %v100 = vmul.f32 %v82, %v99
    %v101 = vsub.f32 1.0, %v82
    %v102 = vmul.f32 %v87, %v97
    %v103 = vmul.f32 %v101, %v102
    %v104 = vadd.f32 %v100, %v103
    %v105 = vsel %vm83, %v104, 0.0
    %106 = vadd.xlane.f32.xlu0 %v105
    %v107 = vpop.xlane.xlu0 %106
    %v108 = vrot.slane %v107, 4
    %v109 = vadd.f32 %v107, %v108
    %v110 = vrot.slane %v109, 2
    %v111 = vadd.f32 %v109, %v110
    %v112 = vrot.slane %v111, 1
    %v113 = vadd.f32 %v111, %v112
    %s114 = vtos %v113
    %v115 = vld [vmem:[#allocation7] sm:$0xff]
    %v116 = vld [vmem:[%s3] sm:$0xff]
    %v117 = vsub.f32 %v115, %v116
    %v118 = vsel %vm79, %v117, 0.0
    %v119 = vand.u32 2147483647, %v118
    %vm120 = vcmask 195584
    %v121 = vsel %vm120, %v119, 0.0
    %122 = vadd.xlane.f32.xlu0 %v121
    %v123 = vpop.xlane.xlu0 %122
    %v124 = vrot.slane %v123, 4
    %v125 = vadd.f32 %v123, %v124
    %v126 = vrot.slane %v125, 2
    %v127 = vadd.f32 %v125, %v126
    %v128 = vrot.slane %v127, 1
    %v129 = vadd.f32 %v127, %v128
    %s130 = vtos %v129
    %v131 = vld [vmem:[#allocation8] sm:$0x1]
    %s132 = smul.f32 %s114, 0.021875
    %s133 = smul.f32 %s130, 0.027083334
    %s134 = sadd.f32 %s132, %s133
    %v135 = vstv %s134
    %v136 = vadd.f32 %v131, %v135
    %vm137 = vcmask 0
    %138 = vst.msk [vmem:[#allocation8] sm:$0x1] %vm137, %v136
    // Predicated region
    $region34: #{tpu_custom_call.1} parent=1 // pred_check
      _
    $region35: #{tpu_custom_call.1} parent=1 // pred_check_branch
      %140 = sbr.rel (0) target = $region37
    $region36: #{tpu_custom_call.1} parent=1 // pred_region
      %142 = vsyncadd [#allocation4], 0
      %s144 = sshll.u32 [#allocation8], 4
      %s145 = int_to_ptr.vmem [resolvable:$true] %s144
      %s146 = sshll.u32 %s4, 4
      %s147 = int_to_ptr.hbm [resolvable:$true] %s146
      %149 = dma.vmem_to_hbm [thread:$0]  %s145, 16, %s147, [#allocation4]
    $region37: #{tpu_custom_call.1} parent=1 // pred_fallthru
      _
    // Predicated region
    $region38: #{tpu_custom_call.1} parent=1 // pred_check
      _
    $region39: #{tpu_custom_call.1} parent=1 // pred_check_branch
      %151 = sbr.rel (0) target = $region41
    $region40: #{tpu_custom_call.1} parent=1 // pred_region
      %153 = dma.done [#allocation4], 16
    $region41: #{tpu_custom_call.1} parent=1 // pred_fallthru
      _
    %154 = vsyncpa [#allocation3], 1
    %155 = vsyncpa [#allocation6], 1
    %156 = vsyncpa [#allocation4], 1

</llo_original>
